<compile_context>
chip_gen: v6e
topology: v6e:2x2x1
jax: 0.10.0
libtpu: 0.0.40
codegen_flags: <defaults>
</compile_context>

<pallas_src>
import functools

import jax
import jax.numpy as jnp
from jax.experimental import pallas as pl
from jax.experimental.pallas import tpu as pltpu


def _swish(x):
    return x * jax.nn.sigmoid(x)


def _round_up(x, m):
    return (x + m - 1) // m * m


def _bf16_eup_supported():
    """v6e/v7x have a bf16 EUP (transcendental) path; v5e and older do not."""
    try:
        kind = jax.devices()[0].device_kind.lower()
    except Exception:
        return False
    return not any(tag in kind for tag in ("v2", "v3", "v4", "v5"))


# ---------------------------------------------------------------------------
# Stage 1: lin_in + act_in (GatedBlock on scalars == swish), once per point.
# Hoisted out of the main kernel's key loop so it runs once instead of nq
# times; result stored in bf16 (it is an MXU operand downstream anyway).
# ---------------------------------------------------------------------------
def lin_in_act_kernel(x_ref, w_in_ref, h1_ref):
    h = jnp.dot(x_ref[...].astype(jnp.float32), w_in_ref[...],
                preferred_element_type=jnp.float32)
    h1_ref[...] = _swish(h).astype(h1_ref.dtype)


# ---------------------------------------------------------------------------
# Stage 2: flash-style spatial aggregation + depthwise mix + lin_out.
# ---------------------------------------------------------------------------
def depthwise_conv_kernel(h1_k_ref, geo_q_ref, geo_kT_ref, w_conv_ref,
                          w_out_ref, o_ref, acc_ref, r2_q_ref, *,
                          inv_p, bf16_exp):
    """One (batch, query-tile, key-tile) grid step.

    h1_k_ref   : [TK, G*M1] bf16  activated key features (precomputed)
    geo_q_ref  : [TQ, 3]          query-tile coordinates
    geo_kT_ref : [3, TK]          key-tile coordinates (transposed, lane-dense)
    w_conv_ref : [G*M1, G*M2]     block-diagonal depthwise channel-mix weight
    w_out_ref  : [G*M2, C_out]    lin_out weight
    o_ref      : [TQ, C_out]      output features of the query tile
    acc_ref    : [TQ, G*M1] f32   spatial-aggregation accumulator (scratch)
    r2_q_ref   : [TQ, 1]    f32   cached |r_q|^2 for the query tile (scratch)
    """
    k_idx = pl.program_id(2)

    @pl.when(k_idx == 0)
    def _():
        acc_ref[...] = jnp.zeros_like(acc_ref)
        gq = geo_q_ref[...].astype(jnp.float32)
        r2_q_ref[...] = jnp.sum(gq * gq, axis=-1, keepdims=True)

    # --- radial pair-kernel tile: K[q, k] = exp(-|r_q - r_k|^2) -------------
    geo_q = geo_q_ref[...].astype(jnp.float32)                 # [TQ, 3]
    geo_kT = geo_kT_ref[...].astype(jnp.float32)               # [3, TK]
    r2_k = jnp.sum(geo_kT * geo_kT, axis=0, keepdims=True)     # [1, TK] sublane reduce
    gram = jnp.dot(geo_q, geo_kT,                              # [TQ, TK] single MXU push
                   preferred_element_type=jnp.float32)
    d2 = jnp.maximum(r2_q_ref[...] + r2_k - 2.0 * gram, 0.0)
    if bf16_exp:
        # v6e/v7x: bf16 EUP path (~2x exp throughput); output feeds MXU as bf16.
        k_tile = jnp.exp((-d2).astype(jnp.bfloat16))
    else:
        # v5e and older: f32 exp, cast to bf16 only for the MXU.
        k_tile = jnp.exp(-d2).astype(jnp.bfloat16)

    # --- spatial aggregation: acc += K_tile @ H1_k ---------------------------
    # bf16 MXU operands, f32 accumulation.  Padded key rows have H1 == 0, so
    # no explicit masking is needed.
    acc_ref[...] += jnp.dot(k_tile, h1_k_ref[...],
                            preferred_element_type=jnp.float32)

    # --- finalize: group channel mix (hoisted), act_mid, lin_out, act_out ---
    @pl.when(k_idx == pl.num_programs(2) - 1)
    def _():
        agg = acc_ref[...] * inv_p                 # 1/P folded here, not on [P,P]
        # depthwise per-group mix (block-diagonal, shared weight), once per q-tile
        mixed = jnp.dot(agg, w_conv_ref[...], preferred_element_type=jnp.float32)
        h2 = _swish(mixed)                         # act_mid
        out = jnp.dot(h2, w_out_ref[...], preferred_element_type=jnp.float32)
        o_ref[...] = _swish(out).astype(o_ref.dtype)   # act_out (final_nonlinearity)


@functools.partial(jax.jit, static_argnames=("groups", "tile"))
def depthwise_convolution(features, geometry, w_in, w_conv, w_out, *,
                          groups, tile=512):
    """features: [B, P, C_in], geometry: [B, P, 3] -> [B, P, C_out].

    w_conv is the SHARED per-group [M1, M2] weight (depthwise, same weight for
    every group); the block-diagonal matrix is built once here, outside the
    kernel, and only used once per query tile inside it.
    """
    B, P, C_in = features.shape
    GM1 = w_in.shape[1]
    M1, M2 = w_conv.shape
    GM2, C_out = w_out.shape
    assert GM1 == groups * M1 and GM2 == groups * M2

    # Block-diagonal depthwise channel-mix weight (group-major channel order).
    # TODO(synk): for large groups*M1 a [TQ*G, M1] reshape-matmul would skip
    # the structural zeros; negligible at these sizes (epilogue runs once/tile).
    w_conv_block = jnp.kron(jnp.eye(groups, dtype=w_conv.dtype), w_conv)

    # Point-axis tiling (flash-style): pad P to a multiple of the tile.
    tile = min(tile, _round_up(P, 8))
    p_pad = _round_up(P, tile)
    if p_pad != P:
        features = jnp.pad(features, ((0, 0), (0, p_pad - P), (0, 0)))
        geometry = jnp.pad(geometry, ((0, 0), (0, p_pad - P), (0, 0)))
    nq = p_pad // tile
    nk = p_pad // tile

    bf16_exp = _bf16_eup_supported()

    # ---- Stage 1: H1 = swish(features @ w_in), once per point, stored bf16.
    h1 = pl.pallas_call(
        lin_in_act_kernel,
        out_shape=jax.ShapeDtypeStruct((B, p_pad, GM1), jnp.bfloat16),
        grid_spec=pltpu.PrefetchScalarGridSpec(
            num_scalar_prefetch=0,
            grid=(B, nq),
            in_specs=[
                pl.BlockSpec((None, tile, C_in), lambda b, q: (b, q, 0)),
                pl.BlockSpec((C_in, GM1), lambda b, q: (0, 0)),
            ],
            out_specs=pl.BlockSpec((None, tile, GM1), lambda b, q: (b, q, 0)),
        ),
        compiler_params=pltpu.CompilerParams(
            dimension_semantics=("parallel", "parallel"),
            vmem_limit_bytes=32 * 1024 * 1024),
    )(features, w_in)

    # Key-side geometry transposed to [B, 3, P]: lane-dense [3, TK] key tiles,
    # sublane reduce for r2_k inside the kernel.
    geometry_T = jnp.swapaxes(geometry, 1, 2)

    kernel = functools.partial(
        depthwise_conv_kernel, inv_p=1.0 / P, bf16_exp=bf16_exp)

    # ---- Stage 2: spatial aggregation + depthwise mix + lin_out ------------
    grid_spec = pltpu.PrefetchScalarGridSpec(
        num_scalar_prefetch=0,
        grid=(B, nq, nk),
        in_specs=[
            pl.BlockSpec((None, tile, GM1), lambda b, q, k: (b, k, 0)),  # H1, key tile (bf16)
            pl.BlockSpec((None, tile, 3),   lambda b, q, k: (b, q, 0)),  # geo, query tile
            pl.BlockSpec((None, 3, tile),   lambda b, q, k: (b, 0, k)),  # geo^T, key tile
            pl.BlockSpec((GM1, GM2),  lambda b, q, k: (0, 0)),           # resident weights
            pl.BlockSpec((GM2, C_out), lambda b, q, k: (0, 0)),
        ],
        out_specs=pl.BlockSpec((None, tile, C_out), lambda b, q, k: (b, q, 0)),
        scratch_shapes=[pltpu.VMEM((tile, GM1), jnp.float32),
                        pltpu.VMEM((tile, 1), jnp.float32)],
    )

    out = pl.pallas_call(
        kernel,
        out_shape=jax.ShapeDtypeStruct((B, p_pad, C_out), jnp.float32),
        grid_spec=grid_spec,
        compiler_params=pltpu.CompilerParams(
            # batch & query-tile axes parallel (v7x megacore); reduction last.
            dimension_semantics=("parallel", "parallel", "arbitrary"),
            vmem_limit_bytes=32 * 1024 * 1024),
    )(h1, geometry, geometry_T, w_conv_block, w_out)
    return out[:, :P, :]


def init_params(key, c_in, m1, m2, c_out, groups):
    """Deterministic synthetic parameters (e3nn-Linear-style 1/sqrt(fan_in) scale)."""
    k1, k2, k3 = jax.random.split(key, 3)
    gm1, gm2 = groups * m1, groups * m2
    w_in = jax.random.normal(k1, (c_in, gm1), jnp.float32) / jnp.sqrt(c_in)
    # shared per-group conv weight (depthwise: same weight for every group)
    w_conv = jax.random.normal(k2, (m1, m2), jnp.float32) / jnp.sqrt(m1)
    w_out = jax.random.normal(k3, (gm2, c_out), jnp.float32) / jnp.sqrt(gm2)
    return w_in, w_conv, w_out


if __name__ == "__main__":
    B, P = 2, 16           # batch, points
    C_IN, C_OUT = 8, 8     # dim(Rs_in), dim(Rs_out)
    M1, M2 = 8, 8          # dim(Rs_mid1), dim(Rs_mid2)
    GROUPS = 4

    key = jax.random.PRNGKey(0)
    kx, kg, kp = jax.random.split(key, 3)
    features = jax.random.normal(kx, (B, P, C_IN), jnp.float32)
    geometry = jax.random.normal(kg, (B, P, 3), jnp.float32)
    w_in, w_conv, w_out = init_params(kp, C_IN, M1, M2, C_OUT, GROUPS)

    out = depthwise_convolution(features, geometry, w_in, w_conv, w_out,
                                groups=GROUPS)
    out = jax.block_until_ready(out)
    assert out.shape == (B, P, C_OUT), out.shape
    assert jnp.all(jnp.isfinite(out))
    print("KERNEL_OK")
</pallas_src>

<mosaic_0001>
module attributes {stable_mosaic.version = 11 : i64} {
  func.func @lin_in_act_kernel(%arg0: i32, %arg1: i32, %arg2: memref<1x16x8xf32, #tpu.memory_space<vmem>>, %arg3: memref<8x32xf32, #tpu.memory_space<vmem>>, %arg4: memref<1x16x32xbf16, #tpu.memory_space<vmem>>) attributes {dimension_semantics = [#tpu.dimension_semantics<parallel>, #tpu.dimension_semantics<parallel>], iteration_bounds = array<i64: 2, 1>, scalar_prefetch = 0 : i64, scratch_operands = 0 : i64, tpu.core_type = #tpu.core_type<tc>, window_params = [{transform_indices = @transform_0, window_bounds = array<i64: 1, 16, 8>}, {pipeline_mode = #tpu.pipeline_mode<synchronous>, transform_indices = @transform_1, window_bounds = array<i64: 8, 32>}, {transform_indices = @transform_2, window_bounds = array<i64: 1, 16, 32>}]} {
    %c0 = arith.constant 0 : index
    %c0_0 = arith.constant 0 : index
    %c0_1 = arith.constant 0 : index
    %0 = vector.load %arg2[%c0, %c0_0, %c0_1] : memref<1x16x8xf32, #tpu.memory_space<vmem>>, vector<1x16x8xf32>
    %1 = vector.shape_cast %0 : vector<1x16x8xf32> to vector<16x8xf32>
    %c0_2 = arith.constant 0 : index
    %c0_3 = arith.constant 0 : index
    %2 = vector.load %arg3[%c0_2, %c0_3] : memref<8x32xf32, #tpu.memory_space<vmem>>, vector<8x32xf32>
    %cst = arith.constant dense<0.000000e+00> : vector<16x32xf32>
    %3 = tpu.matmul %1, %2, %cst {dimension_numbers = #tpu.dot_dimension_numbers<[1], [0], [0], [1], [0, 0, 1, 1], [], []>} : vector<16x8xf32>, vector<8x32xf32>, vector<16x32xf32> -> vector<16x32xf32>
    %4 = arith.negf %3 : vector<16x32xf32>
    %5 = math.exp %4 : vector<16x32xf32>
    %cst_4 = arith.constant 1.000000e+00 : f32
    %6 = vector.broadcast %cst_4 : f32 to vector<16x32xf32>
    %7 = arith.addf %6, %5 : vector<16x32xf32>
    %8 = arith.divf %6, %7 : vector<16x32xf32>
    %9 = arith.mulf %3, %8 : vector<16x32xf32>
    %10 = arith.truncf %9 : vector<16x32xf32> to vector<16x32xbf16>
    %c0_5 = arith.constant 0 : index
    %c0_6 = arith.constant 0 : index
    %c0_7 = arith.constant 0 : index
    %11 = vector.load %arg4[%c0_5, %c0_6, %c0_7] : memref<1x16x32xbf16, #tpu.memory_space<vmem>>, vector<1x16x32xbf16>
    %12 = vector.shape_cast %11 : vector<1x16x32xbf16> to vector<16x32xbf16>
    %13 = vector.shape_cast %10 : vector<16x32xbf16> to vector<1x16x32xbf16>
    tpu.vector_store %arg4[%c0_5, %c0_6, %c0_7], %13 {strides = array<i32>} : memref<1x16x32xbf16, #tpu.memory_space<vmem>>, vector<1x16x32xbf16>,
    return
  }
  func.func @transform_0(%arg0: i32, %arg1: i32) -> (i32, i32, i32) {
    %c0_i32 = arith.constant 0 : i32
    %c0_i32_0 = arith.constant 0 : i32
    return %arg0, %arg1, %c0_i32 : i32, i32, i32
  }
  func.func @transform_1(%arg0: i32, %arg1: i32) -> (i32, i32) {
    %c0_i32 = arith.constant 0 : i32
    %c0_i32_0 = arith.constant 0 : i32
    %c0_i32_1 = arith.constant 0 : i32
    return %c0_i32, %c0_i32_0 : i32, i32
  }
  func.func @transform_2(%arg0: i32, %arg1: i32) -> (i32, i32, i32) {
    %c0_i32 = arith.constant 0 : i32
    %c0_i32_0 = arith.constant 0 : i32
    return %arg0, %arg1, %c0_i32 : i32, i32, i32
  }
}

module attributes {stable_mosaic.version = 11 : i64} {
  func.func @depthwise_conv_kernel(%arg0: i32, %arg1: i32, %arg2: i32, %arg3: memref<1x16x32xbf16, #tpu.memory_space<vmem>>, %arg4: memref<1x16x3xf32, #tpu.memory_space<vmem>>, %arg5: memref<1x3x16xf32, #tpu.memory_space<vmem>>, %arg6: memref<32x32xf32, #tpu.memory_space<vmem>>, %arg7: memref<32x8xf32, #tpu.memory_space<vmem>>, %arg8: memref<1x16x8xf32, #tpu.memory_space<vmem>>, %arg9: memref<16x32xf32, #tpu.memory_space<vmem>>, %arg10: memref<16x1xf32, #tpu.memory_space<vmem>>) attributes {dimension_semantics = [#tpu.dimension_semantics<parallel>, #tpu.dimension_semantics<parallel>, #tpu.dimension_semantics<arbitrary>], iteration_bounds = array<i64: 2, 1, 1>, scalar_prefetch = 0 : i64, scratch_operands = 2 : i64, tpu.core_type = #tpu.core_type<tc>, window_params = [{transform_indices = @transform_0, window_bounds = array<i64: 1, 16, 32>}, {transform_indices = @transform_1, window_bounds = array<i64: 1, 16, 3>}, {transform_indices = @transform_2, window_bounds = array<i64: 1, 3, 16>}, {pipeline_mode = #tpu.pipeline_mode<synchronous>, transform_indices = @transform_3, window_bounds = array<i64: 32, 32>}, {pipeline_mode = #tpu.pipeline_mode<synchronous>, transform_indices = @transform_4, window_bounds = array<i64: 32, 8>}, {transform_indices = @transform_5, window_bounds = array<i64: 1, 16, 8>}]} {
    %c0_i32 = arith.constant 0 : i32
    %0 = arith.cmpi eq, %arg2, %c0_i32 : i32
    %1 = arith.extui %0 : i1 to i32
    %c0_i32_0 = arith.constant 0 : i32
    %2 = arith.cmpi ne, %1, %c0_i32_0 : i32
    scf.if %2 {
      %cst_22 = arith.constant 0.000000e+00 : f32
      %33 = vector.broadcast %cst_22 : f32 to vector<16x32xf32>
      %c0_23 = arith.constant 0 : index
      %c0_24 = arith.constant 0 : index
      %34 = vector.load %arg9[%c0_23, %c0_24] : memref<16x32xf32, #tpu.memory_space<vmem>>, vector<16x32xf32>
      tpu.vector_store %arg9[%c0_23, %c0_24], %33 {strides = array<i32>} : memref<16x32xf32, #tpu.memory_space<vmem>>, vector<16x32xf32>,
      %c0_25 = arith.constant 0 : index
      %c0_26 = arith.constant 0 : index
      %c0_27 = arith.constant 0 : index
      %35 = vector.load %arg4[%c0_25, %c0_26, %c0_27] : memref<1x16x3xf32, #tpu.memory_space<vmem>>, vector<1x16x3xf32>
      %36 = vector.shape_cast %35 : vector<1x16x3xf32> to vector<16x3xf32>
      %37 = arith.mulf %36, %36 : vector<16x3xf32>
      %cst_28 = arith.constant dense<0.000000e+00> : vector<16xf32>
      %38 = vector.multi_reduction <add>, %37, %cst_28 [1] : vector<16x3xf32> to vector<16xf32>
      %39 = vector.shape_cast %38 : vector<16xf32> to vector<16x1xf32>
      %c0_29 = arith.constant 0 : index
      %c0_30 = arith.constant 0 : index
      %40 = vector.load %arg10[%c0_29, %c0_30] : memref<16x1xf32, #tpu.memory_space<vmem>>, vector<16x1xf32>
      tpu.vector_store %arg10[%c0_29, %c0_30], %39 {strides = array<i32>} : memref<16x1xf32, #tpu.memory_space<vmem>>, vector<16x1xf32>,
    } else {
    }
    %c0 = arith.constant 0 : index
    %c0_1 = arith.constant 0 : index
    %c0_2 = arith.constant 0 : index
    %3 = vector.load %arg4[%c0, %c0_1, %c0_2] : memref<1x16x3xf32, #tpu.memory_space<vmem>>, vector<1x16x3xf32>
    %4 = vector.shape_cast %3 : vector<1x16x3xf32> to vector<16x3xf32>
    %c0_3 = arith.constant 0 : index
    %c0_4 = arith.constant 0 : index
    %c0_5 = arith.constant 0 : index
    %5 = vector.load %arg5[%c0_3, %c0_4, %c0_5] : memref<1x3x16xf32, #tpu.memory_space<vmem>>, vector<1x3x16xf32>
    %6 = vector.shape_cast %5 : vector<1x3x16xf32> to vector<3x16xf32>
    %7 = arith.mulf %6, %6 : vector<3x16xf32>
    %cst = arith.constant dense<0.000000e+00> : vector<16xf32>
    %8 = vector.multi_reduction <add>, %7, %cst [0] : vector<3x16xf32> to vector<16xf32>
    %9 = vector.shape_cast %8 : vector<16xf32> to vector<1x16xf32>
    %cst_6 = arith.constant dense<0.000000e+00> : vector<16x16xf32>
    %10 = tpu.matmul %4, %6, %cst_6 {dimension_numbers = #tpu.dot_dimension_numbers<[1], [0], [0], [1], [0, 0, 1, 1], [], []>} : vector<16x3xf32>, vector<3x16xf32>, vector<16x16xf32> -> vector<16x16xf32>
    %c0_7 = arith.constant 0 : index
    %c0_8 = arith.constant 0 : index
    %11 = vector.load %arg10[%c0_7, %c0_8] : memref<16x1xf32, #tpu.memory_space<vmem>>, vector<16x1xf32>
    %12 = vector.broadcast %11 : vector<16x1xf32> to vector<16x16xf32>
    %13 = vector.broadcast %9 : vector<1x16xf32> to vector<16x16xf32>
    %14 = arith.addf %12, %13 : vector<16x16xf32>
    %cst_9 = arith.constant 2.000000e+00 : f32
    %15 = vector.broadcast %cst_9 : f32 to vector<16x16xf32>
    %16 = arith.mulf %15, %10 : vector<16x16xf32>
    %17 = arith.subf %14, %16 : vector<16x16xf32>
    %cst_10 = arith.constant 0.000000e+00 : f32
    %18 = vector.broadcast %cst_10 : f32 to vector<16x16xf32>
    %19 = arith.maximumf %17, %18 : vector<16x16xf32>
    %cst_11 = arith.constant 0.000000e+00 : f32
    %20 = vector.broadcast %cst_11 : f32 to vector<16x16xf32>
    %21 = arith.subf %20, %19 : vector<16x16xf32>
    %22 = arith.truncf %21 : vector<16x16xf32> to vector<16x16xbf16>
    %23 = math.exp %22 : vector<16x16xbf16>
    %c0_12 = arith.constant 0 : index
    %c0_13 = arith.constant 0 : index
    %24 = vector.load %arg9[%c0_12, %c0_13] : memref<16x32xf32, #tpu.memory_space<vmem>>, vector<16x32xf32>
    %c0_14 = arith.constant 0 : index
    %c0_15 = arith.constant 0 : index
    %c0_16 = arith.constant 0 : index
    %25 = vector.load %arg3[%c0_14, %c0_15, %c0_16] : memref<1x16x32xbf16, #tpu.memory_space<vmem>>, vector<1x16x32xbf16>
    %26 = vector.shape_cast %25 : vector<1x16x32xbf16> to vector<16x32xbf16>
    %cst_17 = arith.constant dense<0.000000e+00> : vector<16x32xf32>
    %27 = tpu.matmul %23, %26, %cst_17 {dimension_numbers = #tpu.dot_dimension_numbers<[1], [0], [0], [1], [0, 0, 1, 1], [], []>} : vector<16x16xbf16>, vector<16x32xbf16>, vector<16x32xf32> -> vector<16x32xf32>
    %28 = arith.addf %24, %27 : vector<16x32xf32>
    %c0_18 = arith.constant 0 : index
    %c0_19 = arith.constant 0 : index
    %29 = vector.load %arg9[%c0_18, %c0_19] : memref<16x32xf32, #tpu.memory_space<vmem>>, vector<16x32xf32>
    tpu.vector_store %arg9[%c0_18, %c0_19], %28 {strides = array<i32>} : memref<16x32xf32, #tpu.memory_space<vmem>>, vector<16x32xf32>,
    %c0_i32_20 = arith.constant 0 : i32
    %30 = arith.cmpi eq, %arg2, %c0_i32_20 : i32
    %31 = arith.extui %30 : i1 to i32
    %c0_i32_21 = arith.constant 0 : i32
    %32 = arith.cmpi ne, %31, %c0_i32_21 : i32
    scf.if %32 {
      %c0_22 = arith.constant 0 : index
      %c0_23 = arith.constant 0 : index
      %33 = vector.load %arg9[%c0_22, %c0_23] : memref<16x32xf32, #tpu.memory_space<vmem>>, vector<16x32xf32>
      %cst_24 = arith.constant 6.250000e-02 : f32
      %34 = vector.broadcast %cst_24 : f32 to vector<16x32xf32>
      %35 = arith.mulf %33, %34 : vector<16x32xf32>
      %c0_25 = arith.constant 0 : index
      %c0_26 = arith.constant 0 : index
      %36 = vector.load %arg6[%c0_25, %c0_26] : memref<32x32xf32, #tpu.memory_space<vmem>>, vector<32x32xf32>
      %cst_27 = arith.constant dense<0.000000e+00> : vector<16x32xf32>
      %37 = tpu.matmul %35, %36, %cst_27 {dimension_numbers = #tpu.dot_dimension_numbers<[1], [0], [0], [1], [0, 0, 1, 1], [], []>} : vector<16x32xf32>, vector<32x32xf32>, vector<16x32xf32> -> vector<16x32xf32>
      %38 = arith.negf %37 : vector<16x32xf32>
      %39 = math.exp %38 : vector<16x32xf32>
      %cst_28 = arith.constant 1.000000e+00 : f32
      %40 = vector.broadcast %cst_28 : f32 to vector<16x32xf32>
      %41 = arith.addf %40, %39 : vector<16x32xf32>
      %42 = arith.divf %40, %41 : vector<16x32xf32>
      %43 = arith.mulf %37, %42 : vector<16x32xf32>
      %c0_29 = arith.constant 0 : index
      %c0_30 = arith.constant 0 : index
      %44 = vector.load %arg7[%c0_29, %c0_30] : memref<32x8xf32, #tpu.memory_space<vmem>>, vector<32x8xf32>
      %cst_31 = arith.constant dense<0.000000e+00> : vector<16x8xf32>
      %45 = tpu.matmul %43, %44, %cst_31 {dimension_numbers = #tpu.dot_dimension_numbers<[1], [0], [0], [1], [0, 0, 1, 1], [], []>} : vector<16x32xf32>, vector<32x8xf32>, vector<16x8xf32> -> vector<16x8xf32>
      %46 = arith.negf %45 : vector<16x8xf32>
      %47 = math.exp %46 : vector<16x8xf32>
      %cst_32 = arith.constant 1.000000e+00 : f32
      %48 = vector.broadcast %cst_32 : f32 to vector<16x8xf32>
      %49 = arith.addf %48, %47 : vector<16x8xf32>
      %50 = arith.divf %48, %49 : vector<16x8xf32>
      %51 = arith.mulf %45, %50 : vector<16x8xf32>
      %c0_33 = arith.constant 0 : index
      %c0_34 = arith.constant 0 : index
      %c0_35 = arith.constant 0 : index
      %52 = vector.load %arg8[%c0_33, %c0_34, %c0_35] : memref<1x16x8xf32, #tpu.memory_space<vmem>>, vector<1x16x8xf32>
      %53 = vector.shape_cast %52 : vector<1x16x8xf32> to vector<16x8xf32>
      %54 = vector.shape_cast %51 : vector<16x8xf32> to vector<1x16x8xf32>
      tpu.vector_store %arg8[%c0_33, %c0_34, %c0_35], %54 {strides = array<i32>} : memref<1x16x8xf32, #tpu.memory_space<vmem>>, vector<1x16x8xf32>,
    } else {
    }
    return
  }
  func.func @transform_0(%arg0: i32, %arg1: i32, %arg2: i32) -> (i32, i32, i32) {
    %c0_i32 = arith.constant 0 : i32
    %c0_i32_0 = arith.constant 0 : i32
    return %arg0, %arg2, %c0_i32 : i32, i32, i32
  }
  func.func @transform_1(%arg0: i32, %arg1: i32, %arg2: i32) -> (i32, i32, i32) {
    %c0_i32 = arith.constant 0 : i32
    %c0_i32_0 = arith.constant 0 : i32
    return %arg0, %arg1, %c0_i32 : i32, i32, i32
  }
  func.func @transform_2(%arg0: i32, %arg1: i32, %arg2: i32) -> (i32, i32, i32) {
    %c0_i32 = arith.constant 0 : i32
    %c0_i32_0 = arith.constant 0 : i32
    return %arg0, %c0_i32, %arg2 : i32, i32, i32
  }
  func.func @transform_3(%arg0: i32, %arg1: i32, %arg2: i32) -> (i32, i32) {
    %c0_i32 = arith.constant 0 : i32
    %c0_i32_0 = arith.constant 0 : i32
    %c0_i32_1 = arith.constant 0 : i32
    return %c0_i32, %c0_i32_0 : i32, i32
  }
  func.func @transform_4(%arg0: i32, %arg1: i32, %arg2: i32) -> (i32, i32) {
    %c0_i32 = arith.constant 0 : i32
    %c0_i32_0 = arith.constant 0 : i32
    %c0_i32_1 = arith.constant 0 : i32
    return %c0_i32, %c0_i32_0 : i32, i32
  }
  func.func @transform_5(%arg0: i32, %arg1: i32, %arg2: i32) -> (i32, i32, i32) {
    %c0_i32 = arith.constant 0 : i32
    %c0_i32_0 = arith.constant 0 : i32
    return %arg0, %arg1, %c0_i32 : i32, i32, i32
  }
}

</mosaic_0001>

<llo_original>
// kernel: depthwise_convolution.2
$region0: #{depthwise_convolution.2}
  #allocation0 [shape = 'u32[]', space=smem, size = 0x4, offset = 0x4, fixed_abs, tag = 'smem constant byte address 0x4 - core index']
  #allocation1 [shape = 'u32[144,128]{1,0:T(1,128)}', space=vmem, size = 0x12000, scoped, tag = 'internal scratch']
  %s0 = inlined_call_operand.vmem [shape: f32[2,16,8], index: 0, kind: input, shape index: {}]
  %s1 = inlined_call_operand.vmem [shape: f32[8,32], index: 1, kind: input, shape index: {}]
  %s2 = inlined_call_operand.vmem [shape: bf16[2,16,32], index: 2, kind: output, shape index: {}]
  %s3 = sld [smem:[#allocation0]]
  $region41: #{depthwise_convolution.2} parent=0
    _
  %s5 = ssub.s32 1, %s3
  %s6 = scalar_select 0, %s5, %s3
  loop: start=0, step=1, limit=4
  $region2: #{depthwise_convolution.2} parent=0 // loop_pre_header
    _
  $region3: #{depthwise_convolution.2} parent=0 // loop_header
    %s8 = sphi 0, %s12
    %p9 = scmp.ge.s32.totalorder %s8, 4
    %s15 = sphi 0, %s27
    %s16 = sphi 0, %s23
    %s17 = sphi 0, %s15
    %s18 = sphi 0, %s16
    %s19 = sphi 0, %s17
    %s20 = sphi 0, %s18
    %s32 = sphi 0, %s34
    %s35 = sphi 0, %s32
    %s36 = sphi 0, %s35
    %s52 = sphi 0, %s36
    %s56 = sphi 0, %s56
    %s58 = sphi 0, %s56
    %s59 = sphi 0, %s58
    %s73 = sphi 0, %s59
    %s81 = sphi 0, %s83
    %s84 = sphi 0, %s81
    %s85 = sphi 0, %s84
    %s101 = sphi 0, %s85
  $region4: #{depthwise_convolution.2} parent=0 // loop_header_branch
    %11 = sbr.rel (%p9) target = $region8
  $region5: #{depthwise_convolution.2} parent=0 // loop_body
    %s13 = ssub.s32 %s8, 1
    %s14 = ssub.s32 %s8, 2
    %s21 = sadd.s32 1, %s16
    %p22 = scmp.ge.s32.totalorder %s21, 1
    %s23 = scalar_select %p22, 0, %s21
    %s24 = sadd.s32 1, %s15
    %s25 = scalar_select %p22, %s24, %s15
    %p26 = scmp.ge.s32.totalorder %s25, 2
    %s27 = scalar_select %p26, 0, %s25
    %s28 = ssub.s32 %s15, %s27
    %s29 = ssub.s32 %s16, %s23
    %s30 = sor.u32 %s28, %s29
    %p31 = scmp.eq.s32.totalorder %s30, 0
    %s33 = sadd.s32 %s32, 1
    %s34 = scalar_select %p31, %s32, %s33
    %p37 = pneg %p31
    %p38 = scmp.eq.s32.totalorder %s8, 1
    %p39 = por %p37, %p38
    %p40 = scmp.ne.s32.totalorder %s32, %s35
    %p41 = scmp.eq.s32.totalorder %s8, 0
    %p42 = por %p40, %p41
    %p43 = scmp.ne.s32.totalorder %s32, %s35
    %p44 = scmp.eq.s32.totalorder %s13, 1
    %p45 = por %p43, %p44
    %p46 = scmp.ne.s32.totalorder %s35, %s36
    %p47 = scmp.eq.s32.totalorder %s13, 0
    %p48 = por %p46, %p47
    %p49 = scmp.ne.s32.totalorder %s35, %s36
    %p50 = scmp.eq.s32.totalorder %s14, 1
    %p51 = por %p49, %p50
    %p53 = scmp.ne.s32.totalorder %s36, %s52
    %p54 = scmp.eq.s32.totalorder %s14, 0
    %p55 = por %p53, %p54
    %s57 = sadd.s32 %s56, 1
    %p60 = scmp.eq.s32.totalorder %s8, 1
    %p61 = scmp.ne.s32.totalorder %s56, %s58
    %p62 = scmp.eq.s32.totalorder %s8, 0
    %p63 = por %p61, %p62
    %p64 = scmp.ne.s32.totalorder %s56, %s58
    %p65 = scmp.eq.s32.totalorder %s13, 1
    %p66 = por %p64, %p65
    %p67 = scmp.ne.s32.totalorder %s58, %s59
    %p68 = scmp.eq.s32.totalorder %s13, 0
    %p69 = por %p67, %p68
    %p70 = scmp.ne.s32.totalorder %s58, %s59
    %p71 = scmp.eq.s32.totalorder %s14, 1
    %p72 = por %p70, %p71
    %p74 = scmp.ne.s32.totalorder %s59, %s73
    %p75 = scmp.eq.s32.totalorder %s14, 0
    %p76 = por %p74, %p75
    %s77 = ssub.s32 %s15, %s27
    %s78 = ssub.s32 %s16, %s23
    %s79 = sor.u32 %s77, %s78
    %p80 = scmp.eq.s32.totalorder %s79, 0
    %s82 = sadd.s32 %s81, 1
    %s83 = scalar_select %p80, %s81, %s82
    %p86 = pneg %p80
    %p87 = scmp.eq.s32.totalorder %s8, 1
    %p88 = por %p86, %p87
    %p89 = scmp.ne.s32.totalorder %s81, %s84
    %p90 = scmp.eq.s32.totalorder %s8, 0
    %p91 = por %p89, %p90
    %p92 = scmp.ne.s32.totalorder %s81, %s84
    %p93 = scmp.eq.s32.totalorder %s13, 1
    %p94 = por %p92, %p93
    %p95 = scmp.ne.s32.totalorder %s84, %s85
    %p96 = scmp.eq.s32.totalorder %s13, 0
    %p97 = por %p95, %p96
    %p98 = scmp.ne.s32.totalorder %s84, %s85
    %p99 = scmp.eq.s32.totalorder %s14, 1
    %p100 = por %p98, %p99
    %p102 = scmp.ne.s32.totalorder %s85, %s101
    %p103 = scmp.eq.s32.totalorder %s14, 0
    %p104 = por %p102, %p103
    %p105 = scmp.le.s32.totalorder 1, %s8
    %p106 = scmp.lt.s32.totalorder %s8, 3
    %p107 = pnand %p105, %p106
    %p108 = pneg %p107
    // Predicated region
    $region9: #{depthwise_convolution.2} parent=5 // pred_check
      _
    $region10: #{depthwise_convolution.2} parent=5 // pred_check_branch
      %110 = sbr.rel (%p107) target = $region12
    $region11: #{depthwise_convolution.2} parent=5 // pred_region
      %s111 = ssub.s32 %s8, 1
      // Predicated region
      $region13: #{depthwise_convolution.2} parent=11 // pred_check
        %p112 = pneg %p69
      $region14: #{depthwise_convolution.2} parent=11 // pred_check_branch
        %114 = sbr.rel (%p112) target = $region16
      $region15: #{depthwise_convolution.2} parent=11 // pred_region
        _
      $region16: #{depthwise_convolution.2} parent=11 // pred_fallthru
        _
    $region12: #{depthwise_convolution.2} parent=5 // pred_fallthru
      _
    %p115 = scmp.lt.s32.totalorder %s8, 2
    // Predicated region
    $region17: #{depthwise_convolution.2} parent=5 // pred_check
      %p116 = pneg %p115
    $region18: #{depthwise_convolution.2} parent=5 // pred_check_branch
      %118 = sbr.rel (%p116) target = $region20
    $region19: #{depthwise_convolution.2} parent=5 // pred_region
      // Predicated region
      $region21: #{depthwise_convolution.2} parent=19 // pred_check
        %p119 = pneg %p42
      $region22: #{depthwise_convolution.2} parent=19 // pred_check_branch
        %121 = sbr.rel (%p119) target = $region24
      $region23: #{depthwise_convolution.2} parent=19 // pred_region
        %s122 = smul.u32 2, %s16
        %p123 = scmp.lt.s32.totalorder %s15, 1
        %s124 = scalar_select %p123, %s15, 1
        %p125 = scmp.lt.s32.totalorder %s122, 1
        %s126 = scalar_select %p125, %s122, 1
        %s127 = smul.addr %s124, 2
        %s128 = sadd.s32 %s126, %s127
        %s129 = smul.addr %s128, 8
        %s130 = scalar_lea.vmem %s0, %s129
        %s131 = smul.u32 2, %s16
      $region24: #{depthwise_convolution.2} parent=19 // pred_fallthru
        _
    $region20: #{depthwise_convolution.2} parent=5 // pred_fallthru
      _
    %p132 = scmp.le.s32.totalorder 1, %s8
    %p133 = scmp.lt.s32.totalorder %s8, 3
    %p134 = pnand %p132, %p133
    %p135 = pneg %p134
    // Predicated region
    $region25: #{depthwise_convolution.2} parent=5 // pred_check
      _
    $region26: #{depthwise_convolution.2} parent=5 // pred_check_branch
      %137 = sbr.rel (%p134) target = $region28
    $region27: #{depthwise_convolution.2} parent=5 // pred_region
      %s138 = ssub.s32 %s8, 1
      %s139 = smul.u32 2, %s18
      %p140 = scmp.lt.s32.totalorder %s17, 1
      %s141 = scalar_select %p140, %s17, 1
      %p142 = scmp.lt.s32.totalorder %s139, 1
      %s143 = scalar_select %p142, %s139, 1
      %s144 = smul.addr %s141, 2
      %s145 = sadd.s32 %s143, %s144
      %s146 = smul.addr %s145, 8
      %s147 = scalar_lea.vmem %s0, %s146
      %p148 = pneg %p48
      %p149 = pneg %p45
      %p150 = pneg %p69
      %p151 = pneg %p66
      %p152 = pneg %p97
      %p153 = pneg %p94
      %s154 = smul.u32 2, %s18
      %p155 = scmp.lt.s32.totalorder %s17, 1
      %s156 = scalar_select %p155, %s17, 1
      %p157 = scmp.lt.s32.totalorder %s154, 1
      %s158 = scalar_select %p157, %s154, 1
      %s159 = smul.addr %s156, 2
      %s160 = sadd.s32 %s158, %s159
      %s161 = smul.addr %s160, 4
      %s162 = scalar_lea.vmem %s2, %s161
      %s163 = smul.u32 2, %s18
      %p164 = scmp.lt.s32.totalorder %s17, 1
      %s165 = scalar_select %p164, %s17, 1
      %p166 = scmp.lt.s32.totalorder %s163, 1
      %s167 = scalar_select %p166, %s163, 1
      %s168 = smul.addr %s165, 2
      %s169 = sadd.s32 %s167, %s168
      %s170 = smul.addr %s169, 8
      %s171 = scalar_lea.vmem %s0, %s170
      %s172 = smul.u32 2, %s18
      %s173 = smul.u32 2, %s18
      %p174 = scmp.lt.s32.totalorder %s17, 1
      %s175 = scalar_select %p174, %s17, 1
      %p176 = scmp.lt.s32.totalorder %s173, 1
      %s177 = scalar_select %p176, %s173, 1
      %s178 = smul.addr %s175, 2
      %s179 = sadd.s32 %s177, %s178
      %s180 = smul.addr %s179, 4
      %s181 = scalar_lea.vmem %s2, %s180
      %s182 = smul.u32 2, %s18
      %v183 = vld [vmem:[%s171] sm:$0xff]
      %v184 = vld [vmem:[%s171 + $0x8] sm:$0xff]
      %v185 = vld [vmem:[%s1] sm:$0xff]
      %vm186 = vcmask 64512
      %v188 = vsel %vm186, %v183, 0
      %v191 = vsel %vm186, %v184, 0
      %193 = vmatprep.subr.mxu0 0.0
      %194 = vmatpush1.msra.mxu0 0.0
      %195 = vmatprep.subr.mxu0 0.0
      %196 = vmatpush1.msra.mxu0 0.0
      %197 = vmatprep.subr.mxu0 0.0
      %198 = vmatpush1.msra.mxu0 0.0
      %199 = vmatprep.subr.mxu0 0.0
      %200 = vmatpush1.msra.mxu0 0.0
      %201 = vmatprep.subr.mxu0 0.0
      %202 = vmatpush1.msra.mxu0 0.0
      %203 = vmatprep.subr.mxu0 0.0
      %204 = vmatpush1.msra.mxu0 0.0
      %205 = vmatprep.subr.mxu0 0.0
      %206 = vmatpush1.msra.mxu0 0.0
      %207 = vmatprep.subr.mxu0 0.0
      %208 = vmatpush1.msra.mxu0 0.0
      %209 = vmatprep.subr.mxu0 0.0
      %210 = vmatpush1.msra.mxu0 0.0
      %211 = vmatprep.subr.mxu0 0.0
      %212 = vmatpush1.msra.mxu0 0.0
      %213 = vmatprep.subr.mxu0 0.0
      %214 = vmatpush1.msra.mxu0 0.0
      %215 = vmatprep.subr.mxu0 0.0
      %216 = vmatpush1.msra.mxu0 0.0
      %217 = vmatprep.subr.mxu0 0.0
      %218 = vmatpush1.msra.mxu0 0.0
      %219 = vmatprep.subr.mxu0 0.0
      %220 = vmatpush1.msra.mxu0 0.0
      %221 = vmatprep.subr.mxu0 0.0
      %222 = vmatpush1.msra.mxu0 0.0
      %223 = vmatprep.subr.mxu0 0.0
      %224 = vmatpush1.msra.mxu0 %v185
      %225 = vmatprep.subr.mxu0 0.0
      %226 = vmatpush2.msra.mxu0 0.0
      %227 = vmatprep.subr.mxu0 0.0
      %228 = vmatpush2.msra.mxu0 0.0
      %229 = vmatprep.subr.mxu0 0.0
      %230 = vmatpush2.msra.mxu0 0.0
      %231 = vmatprep.subr.mxu0 0.0
      %232 = vmatpush2.msra.mxu0 0.0
      %233 = vmatprep.subr.mxu0 0.0
      %234 = vmatpush2.msra.mxu0 0.0
      %235 = vmatprep.subr.mxu0 0.0
      %236 = vmatpush2.msra.mxu0 0.0
      %237 = vmatprep.subr.mxu0 0.0
      %238 = vmatpush2.msra.mxu0 0.0
      %239 = vmatprep.subr.mxu0 0.0
      %240 = vmatpush2.msra.mxu0 0.0
      %241 = vmatprep.subr.mxu0 0.0
      %242 = vmatpush2.msra.mxu0 0.0
      %243 = vmatprep.subr.mxu0 0.0
      %244 = vmatpush2.msra.mxu0 0.0
      %245 = vmatprep.subr.mxu0 0.0
      %246 = vmatpush2.msra.mxu0 0.0
      %247 = vmatprep.subr.mxu0 0.0
      %248 = vmatpush2.msra.mxu0 0.0
      %249 = vmatprep.subr.mxu0 0.0
      %250 = vmatpush2.msra.mxu0 0.0
      %251 = vmatprep.subr.mxu0 0.0
      %252 = vmatpush2.msra.mxu0 0.0
      %253 = vmatprep.subr.mxu0 0.0
      %254 = vmatpush2.msra.mxu0 0.0
      %255 = vmatprep.subr.mxu0 0.0
      %256 = vmatpush2.msra.mxu0 0.0
      %257 = vmatprep.mubr.f32.mxu0 0.0
      %258 = vmatmul.mubr.f32.gmra.mxu0 %v188
      %v259 = vpop.f32.mrf.mxu0
      %v260 = vadd.f32 0.0, %v259
      %v261 = vpop.f32.mrf.mxu0
      %262 = vmatprep.mubr.f32.mxu0 0.0
      %263 = vmatmul.mubr.f32.gmra.mxu0 %v191
      %v264 = vpop.f32.mrf.mxu0
      %v265 = vadd.f32 0.0, %v264
      %v266 = vpop.f32.mrf.mxu0
      %267 = vdwg.mxu0
      %v268 = vxor.u32 %v260, 2147483648
      %v269 = vxor.u32 %v265, 2147483648
      %v270 = vmul.f32 %v268, 1.442695
      %v271 = vpow.pop %v270
      %v272 = vmul.f32 %v269, 1.442695
      %v273 = vpow.pop %v272
      %v274 = vadd.f32 %v271, 1.0
      %v275 = vadd.f32 %v273, 1.0
      %v276 = vrcp.pop %v274
      %v277 = vmul.f32 1.0, %v276
      %v278 = vrcp.pop %v275
      %v279 = vmul.f32 1.0, %v278
      %v280 = vmul.f32 %v260, %v277
      %v281 = vmul.f32 %v265, %v279
      %v282 = vpack.c.bf16 %v281, %v280
      %v284 = vunpack.c.l.b16 %v282
      %v285 = vunpack.c.h.b16 %v282
      %v286 = vpack.c.b16 %v284, %v284
      %v287 = vpack.c.b16 %v285, %v285
      %vm290 = vcmask 257024
      %291 = vst.msk [vmem:[%s181] sm:$0xf] %vm290, %v286
      %292 = vst.msk [vmem:[%s181 + $0x4] sm:$0xf] %vm290, %v287
      %s293 = smul.u32 2, %s18
      %p294 = scmp.lt.s32.totalorder %s17, 1
      %s295 = scalar_select %p294, %s17, 1
      %p296 = scmp.lt.s32.totalorder %s293, 1
      %s297 = scalar_select %p296, %s293, 1
      %s298 = smul.addr %s295, 2
      %s299 = sadd.s32 %s297, %s298
      %s300 = smul.addr %s299, 4
      %s301 = scalar_lea.vmem %s2, %s300
      // Predicated region
      $region29: #{depthwise_convolution.2} parent=27 // pred_check
        %p302 = pneg %p94
      $region30: #{depthwise_convolution.2} parent=27 // pred_check_branch
        %304 = sbr.rel (%p302) target = $region32
      $region31: #{depthwise_convolution.2} parent=27 // pred_region
        %s305 = smul.u32 2, %s18
      $region32: #{depthwise_convolution.2} parent=27 // pred_fallthru
        _
    $region28: #{depthwise_convolution.2} parent=5 // pred_fallthru
      _
    %p306 = scmp.le.s32.totalorder 2, %s8
    // Predicated region
    $region33: #{depthwise_convolution.2} parent=5 // pred_check
      %p307 = pneg %p306
    $region34: #{depthwise_convolution.2} parent=5 // pred_check_branch
      %309 = sbr.rel (%p307) target = $region36
    $region35: #{depthwise_convolution.2} parent=5 // pred_region
      %s310 = ssub.s32 %s8, 2
      // Predicated region
      $region37: #{depthwise_convolution.2} parent=35 // pred_check
        %p311 = pneg %p100
      $region38: #{depthwise_convolution.2} parent=35 // pred_check_branch
        %313 = sbr.rel (%p311) target = $region40
      $region39: #{depthwise_convolution.2} parent=35 // pred_region
        %s314 = smul.u32 2, %s20
        %p315 = scmp.lt.s32.totalorder %s19, 1
        %s316 = scalar_select %p315, %s19, 1
        %p317 = scmp.lt.s32.totalorder %s314, 1
        %s318 = scalar_select %p317, %s314, 1
        %s319 = smul.addr %s316, 2
        %s320 = sadd.s32 %s318, %s319
        %s321 = smul.addr %s320, 4
        %s322 = scalar_lea.vmem %s2, %s321
      $region40: #{depthwise_convolution.2} parent=35 // pred_fallthru
        _
    $region36: #{depthwise_convolution.2} parent=5 // pred_fallthru
      _
  $region6: #{depthwise_convolution.2} parent=0 // loop_footer
    %s12 = sadd.s32 1, %s8
  $region7: #{depthwise_convolution.2} parent=0 // loop_footer_branch
    %7 = sbr.rel target = $region3
  $region8: #{depthwise_convolution.2} parent=0 // loop_exit
    _

// kernel: depthwise_convolution.3
$region0: #{depthwise_convolution.3}
  #allocation0 [shape = 'u32[]', space=smem, size = 0x4, offset = 0x4, fixed_abs, tag = 'smem constant byte address 0x4 - core index']
  #allocation1 [shape = 'u32[144,128]{1,0:T(1,128)}', space=vmem, size = 0x12000, scoped, tag = 'internal scratch']
  #allocation2 [shape = 'f32[16,32]{1,0:T(8,128)}', space=vmem, size = 0x2000, scoped, tag = 'scratch operand']
  #allocation3 [shape = 'f32[16,1]{1,0:T(8,128)}', space=vmem, size = 0x2000, scoped, tag = 'scratch operand']
  %s0 = inlined_call_operand.vmem [shape: bf16[2,16,32], index: 0, kind: input, shape index: {}]
  %s1 = inlined_call_operand.vmem [shape: f32[2,16,3], index: 1, kind: input, shape index: {}]
  %s2 = inlined_call_operand.vmem [shape: f32[2,3,16], index: 2, kind: input, shape index: {}]
  %s3 = inlined_call_operand.vmem [shape: f32[32,32], index: 3, kind: input, shape index: {}]
  %s4 = inlined_call_operand.vmem [shape: f32[32,8], index: 4, kind: input, shape index: {}]
  %s5 = inlined_call_operand.vmem [shape: f32[2,16,8], index: 5, kind: output, shape index: {}]
  %s6 = sld [smem:[#allocation0]]
  $region61: #{depthwise_convolution.3} parent=0
    _
  %s8 = ssub.s32 1, %s6
  %s9 = scalar_select 0, %s8, %s6
  loop: start=0, step=1, limit=4
  $region2: #{depthwise_convolution.3} parent=0 // loop_pre_header
    _
  $region3: #{depthwise_convolution.3} parent=0 // loop_header
    %s11 = sphi 0, %s15
    %p12 = scmp.ge.s32.totalorder %s11, 4
    %s18 = sphi 0, %s37
    %s19 = sphi 0, %s33
    %s20 = sphi 0, %s29
    %s21 = sphi 0, %s18
    %s22 = sphi 0, %s19
    %s23 = sphi 0, %s20
    %s24 = sphi 0, %s21
    %s25 = sphi 0, %s22
    %s26 = sphi 0, %s23
    %s42 = sphi 0, %s44
    %s45 = sphi 0, %s42
    %s46 = sphi 0, %s45
    %s62 = sphi 0, %s46
    %s70 = sphi 0, %s72
    %s73 = sphi 0, %s70
    %s74 = sphi 0, %s73
    %s90 = sphi 0, %s74
    %s98 = sphi 0, %s100
    %s101 = sphi 0, %s98
    %s102 = sphi 0, %s101
    %s118 = sphi 0, %s102
    %s122 = sphi 0, %s122
    %s124 = sphi 0, %s122
    %s125 = sphi 0, %s124
    %s139 = sphi 0, %s125
    %s143 = sphi 0, %s143
    %s145 = sphi 0, %s143
    %s146 = sphi 0, %s145
    %s160 = sphi 0, %s146
    %s168 = sphi 0, %s170
    %s171 = sphi 0, %s168
    %s172 = sphi 0, %s171
    %s188 = sphi 0, %s172
  $region4: #{depthwise_convolution.3} parent=0 // loop_header_branch
    %14 = sbr.rel (%p12) target = $region8
  $region5: #{depthwise_convolution.3} parent=0 // loop_body
    %s16 = ssub.s32 %s11, 1
    %s17 = ssub.s32 %s11, 2
    %s27 = sadd.s32 1, %s20
    %p28 = scmp.ge.s32.totalorder %s27, 1
    %s29 = scalar_select %p28, 0, %s27
    %s30 = sadd.s32 1, %s19
    %s31 = scalar_select %p28, %s30, %s19
    %p32 = scmp.ge.s32.totalorder %s31, 1
    %s33 = scalar_select %p32, 0, %s31
    %s34 = sadd.s32 1, %s18
    %s35 = scalar_select %p32, %s34, %s18
    %p36 = scmp.ge.s32.totalorder %s35, 2
    %s37 = scalar_select %p36, 0, %s35
    %s38 = ssub.s32 %s18, %s37
    %s39 = ssub.s32 %s20, %s29
    %s40 = sor.u32 %s38, %s39
    %p41 = scmp.eq.s32.totalorder %s40, 0
    %s43 = sadd.s32 %s42, 1
    %s44 = scalar_select %p41, %s42, %s43
    %p47 = pneg %p41
    %p48 = scmp.eq.s32.totalorder %s11, 1
    %p49 = por %p47, %p48
    %p50 = scmp.ne.s32.totalorder %s42, %s45
    %p51 = scmp.eq.s32.totalorder %s11, 0
    %p52 = por %p50, %p51
    %p53 = scmp.ne.s32.totalorder %s42, %s45
    %p54 = scmp.eq.s32.totalorder %s16, 1
    %p55 = por %p53, %p54
    %p56 = scmp.ne.s32.totalorder %s45, %s46
    %p57 = scmp.eq.s32.totalorder %s16, 0
    %p58 = por %p56, %p57
    %p59 = scmp.ne.s32.totalorder %s45, %s46
    %p60 = scmp.eq.s32.totalorder %s17, 1
    %p61 = por %p59, %p60
    %p63 = scmp.ne.s32.totalorder %s46, %s62
    %p64 = scmp.eq.s32.totalorder %s17, 0
    %p65 = por %p63, %p64
    %s66 = ssub.s32 %s18, %s37
    %s67 = ssub.s32 %s19, %s33
    %s68 = sor.u32 %s66, %s67
    %p69 = scmp.eq.s32.totalorder %s68, 0
    %s71 = sadd.s32 %s70, 1
    %s72 = scalar_select %p69, %s70, %s71
    %p75 = pneg %p69
    %p76 = scmp.eq.s32.totalorder %s11, 1
    %p77 = por %p75, %p76
    %p78 = scmp.ne.s32.totalorder %s70, %s73
    %p79 = scmp.eq.s32.totalorder %s11, 0
    %p80 = por %p78, %p79
    %p81 = scmp.ne.s32.totalorder %s70, %s73
    %p82 = scmp.eq.s32.totalorder %s16, 1
    %p83 = por %p81, %p82
    %p84 = scmp.ne.s32.totalorder %s73, %s74
    %p85 = scmp.eq.s32.totalorder %s16, 0
    %p86 = por %p84, %p85
    %p87 = scmp.ne.s32.totalorder %s73, %s74
    %p88 = scmp.eq.s32.totalorder %s17, 1
    %p89 = por %p87, %p88
    %p91 = scmp.ne.s32.totalorder %s74, %s90
    %p92 = scmp.eq.s32.totalorder %s17, 0
    %p93 = por %p91, %p92
    %s94 = ssub.s32 %s18, %s37
    %s95 = ssub.s32 %s20, %s29
    %s96 = sor.u32 %s94, %s95
    %p97 = scmp.eq.s32.totalorder %s96, 0
    %s99 = sadd.s32 %s98, 1
    %s100 = scalar_select %p97, %s98, %s99
    %p103 = pneg %p97
    %p104 = scmp.eq.s32.totalorder %s11, 1
    %p105 = por %p103, %p104
    %p106 = scmp.ne.s32.totalorder %s98, %s101
    %p107 = scmp.eq.s32.totalorder %s11, 0
    %p108 = por %p106, %p107
    %p109 = scmp.ne.s32.totalorder %s98, %s101
    %p110 = scmp.eq.s32.totalorder %s16, 1
    %p111 = por %p109, %p110
    %p112 = scmp.ne.s32.totalorder %s101, %s102
    %p113 = scmp.eq.s32.totalorder %s16, 0
    %p114 = por %p112, %p113
    %p115 = scmp.ne.s32.totalorder %s101, %s102
    %p116 = scmp.eq.s32.totalorder %s17, 1
    %p117 = por %p115, %p116
    %p119 = scmp.ne.s32.totalorder %s102, %s118
    %p120 = scmp.eq.s32.totalorder %s17, 0
    %p121 = por %p119, %p120
    %s123 = sadd.s32 %s122, 1
    %p126 = scmp.eq.s32.totalorder %s11, 1
    %p127 = scmp.ne.s32.totalorder %s122, %s124
    %p128 = scmp.eq.s32.totalorder %s11, 0
    %p129 = por %p127, %p128
    %p130 = scmp.ne.s32.totalorder %s122, %s124
    %p131 = scmp.eq.s32.totalorder %s16, 1
    %p132 = por %p130, %p131
    %p133 = scmp.ne.s32.totalorder %s124, %s125
    %p134 = scmp.eq.s32.totalorder %s16, 0
    %p135 = por %p133, %p134
    %p136 = scmp.ne.s32.totalorder %s124, %s125
    %p137 = scmp.eq.s32.totalorder %s17, 1
    %p138 = por %p136, %p137
    %p140 = scmp.ne.s32.totalorder %s125, %s139
    %p141 = scmp.eq.s32.totalorder %s17, 0
    %p142 = por %p140, %p141
    %s144 = sadd.s32 %s143, 1
    %p147 = scmp.eq.s32.totalorder %s11, 1
    %p148 = scmp.ne.s32.totalorder %s143, %s145
    %p149 = scmp.eq.s32.totalorder %s11, 0
    %p150 = por %p148, %p149
    %p151 = scmp.ne.s32.totalorder %s143, %s145
    %p152 = scmp.eq.s32.totalorder %s16, 1
    %p153 = por %p151, %p152
    %p154 = scmp.ne.s32.totalorder %s145, %s146
    %p155 = scmp.eq.s32.totalorder %s16, 0
    %p156 = por %p154, %p155
    %p157 = scmp.ne.s32.totalorder %s145, %s146
    %p158 = scmp.eq.s32.totalorder %s17, 1
    %p159 = por %p157, %p158
    %p161 = scmp.ne.s32.totalorder %s146, %s160
    %p162 = scmp.eq.s32.totalorder %s17, 0
    %p163 = por %p161, %p162
    %s164 = ssub.s32 %s18, %s37
    %s165 = ssub.s32 %s19, %s33
    %s166 = sor.u32 %s164, %s165
    %p167 = scmp.eq.s32.totalorder %s166, 0
    %s169 = sadd.s32 %s168, 1
    %s170 = scalar_select %p167, %s168, %s169
    %p173 = pneg %p167
    %p174 = scmp.eq.s32.totalorder %s11, 1
    %p175 = por %p173, %p174
    %p176 = scmp.ne.s32.totalorder %s168, %s171
    %p177 = scmp.eq.s32.totalorder %s11, 0
    %p178 = por %p176, %p177
    %p179 = scmp.ne.s32.totalorder %s168, %s171
    %p180 = scmp.eq.s32.totalorder %s16, 1
    %p181 = por %p179, %p180
    %p182 = scmp.ne.s32.totalorder %s171, %s172
    %p183 = scmp.eq.s32.totalorder %s16, 0
    %p184 = por %p182, %p183
    %p185 = scmp.ne.s32.totalorder %s171, %s172
    %p186 = scmp.eq.s32.totalorder %s17, 1
    %p187 = por %p185, %p186
    %p189 = scmp.ne.s32.totalorder %s172, %s188
    %p190 = scmp.eq.s32.totalorder %s17, 0
    %p191 = por %p189, %p190
    %p192 = scmp.le.s32.totalorder 1, %s11
    %p193 = scmp.lt.s32.totalorder %s11, 3
    %p194 = pnand %p192, %p193
    %p195 = pneg %p194
    // Predicated region
    $region9: #{depthwise_convolution.3} parent=5 // pred_check
      _
    $region10: #{depthwise_convolution.3} parent=5 // pred_check_branch
      %197 = sbr.rel (%p194) target = $region12
    $region11: #{depthwise_convolution.3} parent=5 // pred_region
      %s198 = ssub.s32 %s11, 1
      // Predicated region
      $region13: #{depthwise_convolution.3} parent=11 // pred_check
        %p199 = pneg %p135
      $region14: #{depthwise_convolution.3} parent=11 // pred_check_branch
        %201 = sbr.rel (%p199) target = $region16
      $region15: #{depthwise_convolution.3} parent=11 // pred_region
        _
      $region16: #{depthwise_convolution.3} parent=11 // pred_fallthru
        _
      // Predicated region
      $region17: #{depthwise_convolution.3} parent=11 // pred_check
        %p202 = pneg %p156
      $region18: #{depthwise_convolution.3} parent=11 // pred_check_branch
        %204 = sbr.rel (%p202) target = $region20
      $region19: #{depthwise_convolution.3} parent=11 // pred_region
        _
      $region20: #{depthwise_convolution.3} parent=11 // pred_fallthru
        _
    $region12: #{depthwise_convolution.3} parent=5 // pred_fallthru
      _
    %p205 = scmp.lt.s32.totalorder %s11, 2
    // Predicated region
    $region21: #{depthwise_convolution.3} parent=5 // pred_check
      %p206 = pneg %p205
    $region22: #{depthwise_convolution.3} parent=5 // pred_check_branch
      %208 = sbr.rel (%p206) target = $region24
    $region23: #{depthwise_convolution.3} parent=5 // pred_region
      // Predicated region
      $region25: #{depthwise_convolution.3} parent=23 // pred_check
        %p209 = pneg %p52
      $region26: #{depthwise_convolution.3} parent=23 // pred_check_branch
        %211 = sbr.rel (%p209) target = $region28
      $region27: #{depthwise_convolution.3} parent=23 // pred_region
        %s212 = smul.u32 2, %s20
        %p213 = scmp.lt.s32.totalorder %s18, 1
        %s214 = scalar_select %p213, %s18, 1
        %p215 = scmp.lt.s32.totalorder %s212, 1
        %s216 = scalar_select %p215, %s212, 1
        %s217 = smul.addr %s214, 2
        %s218 = sadd.s32 %s216, %s217
        %s219 = smul.addr %s218, 4
        %s220 = scalar_lea.vmem %s0, %s219
        %s221 = smul.u32 2, %s20
      $region28: #{depthwise_convolution.3} parent=23 // pred_fallthru
        _
      // Predicated region
      $region29: #{depthwise_convolution.3} parent=23 // pred_check
        %p222 = pneg %p80
      $region30: #{depthwise_convolution.3} parent=23 // pred_check_branch
        %224 = sbr.rel (%p222) target = $region32
      $region31: #{depthwise_convolution.3} parent=23 // pred_region
        %s225 = smul.u32 2, %s19
        %p226 = scmp.lt.s32.totalorder %s18, 1
        %s227 = scalar_select %p226, %s18, 1
        %p228 = scmp.lt.s32.totalorder %s225, 1
        %s229 = scalar_select %p228, %s225, 1
        %s230 = smul.addr %s227, 2
        %s231 = sadd.s32 %s229, %s230
        %s232 = smul.addr %s231, 8
        %s233 = scalar_lea.vmem %s1, %s232
        %s234 = smul.u32 2, %s19
      $region32: #{depthwise_convolution.3} parent=23 // pred_fallthru
        _
      // Predicated region
      $region33: #{depthwise_convolution.3} parent=23 // pred_check
        %p235 = pneg %p108
      $region34: #{depthwise_convolution.3} parent=23 // pred_check_branch
        %237 = sbr.rel (%p235) target = $region36
      $region35: #{depthwise_convolution.3} parent=23 // pred_region
        %p238 = scmp.lt.s32.totalorder %s18, 1
        %s239 = scalar_select %p238, %s18, 1
        %p240 = scmp.lt.s32.totalorder %s20, 0
        %s241 = scalar_select %p240, %s20, 0
        %s242 = sadd.s32 %s241, %s239
        %s243 = smul.addr %s242, 4
        %s244 = scalar_lea.vmem %s2, %s243
      $region36: #{depthwise_convolution.3} parent=23 // pred_fallthru
        _
    $region24: #{depthwise_convolution.3} parent=5 // pred_fallthru
      _
    %p245 = scmp.le.s32.totalorder 1, %s11
    %p246 = scmp.lt.s32.totalorder %s11, 3
    %p247 = pnand %p245, %p246
    %p248 = pneg %p247
    // Predicated region
    $region37: #{depthwise_convolution.3} parent=5 // pred_check
      _
    $region38: #{depthwise_convolution.3} parent=5 // pred_check_branch
      %250 = sbr.rel (%p247) target = $region40
    $region39: #{depthwise_convolution.3} parent=5 // pred_region
      %s251 = ssub.s32 %s11, 1
      %s252 = smul.u32 2, %s23
      %p253 = scmp.lt.s32.totalorder %s21, 1
      %s254 = scalar_select %p253, %s21, 1
      %p255 = scmp.lt.s32.totalorder %s252, 1
      %s256 = scalar_select %p255, %s252, 1
      %s257 = smul.addr %s254, 2
      %s258 = sadd.s32 %s256, %s257
      %s259 = smul.addr %s258, 4
      %s260 = scalar_lea.vmem %s0, %s259
      %p261 = pneg %p58
      %p262 = pneg %p55
      %s263 = smul.u32 2, %s22
      %p264 = scmp.lt.s32.totalorder %s21, 1
      %s265 = scalar_select %p264, %s21, 1
      %p266 = scmp.lt.s32.totalorder %s263, 1
      %s267 = scalar_select %p266, %s263, 1
      %s268 = smul.addr %s265, 2
      %s269 = sadd.s32 %s267, %s268
      %s270 = smul.addr %s269, 8
      %s271 = scalar_lea.vmem %s1, %s270
      %p272 = pneg %p86
      %p273 = pneg %p83
      %p274 = scmp.lt.s32.totalorder %s21, 1
      %s275 = scalar_select %p274, %s21, 1
      %p276 = scmp.lt.s32.totalorder %s23, 0
      %s277 = scalar_select %p276, %s23, 0
      %s278 = sadd.s32 %s277, %s275
      %s279 = smul.addr %s278, 4
      %s280 = scalar_lea.vmem %s2, %s279
      %p281 = pneg %p114
      %p282 = pneg %p111
      %p283 = pneg %p135
      %p284 = pneg %p132
      %p285 = pneg %p156
      %p286 = pneg %p153
      %p287 = pneg %p184
      %p288 = pneg %p181
      %s289 = smul.u32 2, %s22
      %p290 = scmp.lt.s32.totalorder %s21, 1
      %s291 = scalar_select %p290, %s21, 1
      %p292 = scmp.lt.s32.totalorder %s289, 1
      %s293 = scalar_select %p292, %s289, 1
      %s294 = smul.addr %s291, 2
      %s295 = sadd.s32 %s293, %s294
      %s296 = smul.addr %s295, 8
      %s297 = scalar_lea.vmem %s5, %s296
      %s298 = smul.u32 2, %s23
      %p299 = scmp.lt.s32.totalorder %s21, 1
      %s300 = scalar_select %p299, %s21, 1
      %p301 = scmp.lt.s32.totalorder %s298, 1
      %s302 = scalar_select %p301, %s298, 1
      %s303 = smul.addr %s300, 2
      %s304 = sadd.s32 %s302, %s303
      %s305 = smul.addr %s304, 4
      %s306 = scalar_lea.vmem %s0, %s305
      %s307 = smul.u32 2, %s23
      %s308 = smul.u32 2, %s22
      %p309 = scmp.lt.s32.totalorder %s21, 1
      %s310 = scalar_select %p309, %s21, 1
      %p311 = scmp.lt.s32.totalorder %s308, 1
      %s312 = scalar_select %p311, %s308, 1
      %s313 = smul.addr %s310, 2
      %s314 = sadd.s32 %s312, %s313
      %s315 = smul.addr %s314, 8
      %s316 = scalar_lea.vmem %s1, %s315
      %s317 = smul.u32 2, %s22
      %p318 = scmp.lt.s32.totalorder %s21, 1
      %s319 = scalar_select %p318, %s21, 1
      %p320 = scmp.lt.s32.totalorder %s23, 0
      %s321 = scalar_select %p320, %s23, 0
      %s322 = sadd.s32 %s321, %s319
      %s323 = smul.addr %s322, 4
      %s324 = scalar_lea.vmem %s2, %s323
      %s325 = smul.u32 2, %s22
      %p326 = scmp.lt.s32.totalorder %s21, 1
      %s327 = scalar_select %p326, %s21, 1
      %p328 = scmp.lt.s32.totalorder %s325, 1
      %s329 = scalar_select %p328, %s325, 1
      %s330 = smul.addr %s327, 2
      %s331 = sadd.s32 %s329, %s330
      %s332 = smul.addr %s331, 8
      %s333 = scalar_lea.vmem %s5, %s332
      %s334 = smul.u32 2, %s22
      %p336 = scmp.eq.s32.totalorder %s23, 0
      // Predicated region
      $region41: #{depthwise_convolution.3} parent=39 // pred_check
        %p337 = pneg %p336
      $region42: #{depthwise_convolution.3} parent=39 // pred_check_branch
        %339 = sbr.rel (%p337) target = $region44
      $region43: #{depthwise_convolution.3} parent=39 // pred_region
        %vm340 = vcmask 261120
        %341 = vst.msk [vmem:[#allocation2] sm:$0xff] %vm340, 0.0
        %342 = vst.msk [vmem:[#allocation2 + $0x8] sm:$0xff] %vm340, 0.0
        %v343 = vld [vmem:[%s316] sm:$0xff]
        %v344 = vld [vmem:[%s316 + $0x8] sm:$0xff]
        %v345 = vmul.f32 %v343, %v343
        %v346 = vmul.f32 %v344, %v344
        %vm347 = vcmask 23552
        %v348 = vsel %vm347, %v345, 0.0
        %349 = vadd.xlane.f32.xlu0 %v348
        %v350 = vpop.xlane.xlu0 %349
        %v351 = vsel %vm347, %v346, 0.0
        %352 = vadd.xlane.f32.xlu0 %v351
        %v353 = vpop.xlane.xlu0 %352
        %vm354 = vcmask 7168
        %355 = vst.msk [vmem:[#allocation3] sm:$0xff] %vm354, %v350
        %356 = vst.msk [vmem:[#allocation3 + $0x8] sm:$0xff] %vm354, %v353
      $region44: #{depthwise_convolution.3} parent=39 // pred_fallthru
        _
      %v357 = vld [vmem:[%s316] sm:$0xff]
      %v358 = vld [vmem:[%s316 + $0x8] sm:$0xff]
      %v359 = vld [vmem:[%s324] sm:$0x7]
      %v360 = vmul.f32 %v359, %v359
      %vm361 = vcmask 124928
      %v362 = vsel %vm361, %v360, 0.0
      %v363 = vrot.slane %v362, 4
      %v364 = vadd.f32 %v362, %v363
      %v365 = vrot.slane %v364, 2
      %v366 = vadd.f32 %v364, %v365
      %v367 = vrot.slane %v366, 1
      %v368 = vadd.f32 %v366, %v367
      %vm369 = vcmask 23552
      %v371 = vsel %vm369, %v357, 0
      %v374 = vsel %vm369, %v358, 0
      %vm376 = vcmask 1042432
      %v378 = vsel %vm376, %v359, 0
      %380 = vmatprep.subr.mxu0 0.0
      %381 = vmatpush1.msra.mxu0 0.0
      %382 = vmatprep.subr.mxu0 0.0
      %383 = vmatpush1.msra.mxu0 0.0
      %384 = vmatprep.subr.mxu0 0.0
      %385 = vmatpush1.msra.mxu0 0.0
      %386 = vmatprep.subr.mxu0 0.0
      %387 = vmatpush1.msra.mxu0 0.0
      %388 = vmatprep.subr.mxu0 0.0
      %389 = vmatpush1.msra.mxu0 0.0
      %390 = vmatprep.subr.mxu0 0.0
      %391 = vmatpush1.msra.mxu0 0.0
      %392 = vmatprep.subr.mxu0 0.0
      %393 = vmatpush1.msra.mxu0 0.0
      %394 = vmatprep.subr.mxu0 0.0
      %395 = vmatpush1.msra.mxu0 0.0
      %396 = vmatprep.subr.mxu0 0.0
      %397 = vmatpush1.msra.mxu0 0.0
      %398 = vmatprep.subr.mxu0 0.0
      %399 = vmatpush1.msra.mxu0 0.0
      %400 = vmatprep.subr.mxu0 0.0
      %401 = vmatpush1.msra.mxu0 0.0
      %402 = vmatprep.subr.mxu0 0.0
      %403 = vmatpush1.msra.mxu0 0.0
      %404 = vmatprep.subr.mxu0 0.0
      %405 = vmatpush1.msra.mxu0 0.0
      %406 = vmatprep.subr.mxu0 0.0
      %407 = vmatpush1.msra.mxu0 0.0
      %408 = vmatprep.subr.mxu0 0.0
      %409 = vmatpush1.msra.mxu0 0.0
      %410 = vmatprep.subr.mxu0 0.0
      %411 = vmatpush1.msra.mxu0 %v378
      %412 = vmatprep.subr.mxu0 0.0
      %413 = vmatpush2.msra.mxu0 0.0
      %414 = vmatprep.subr.mxu0 0.0
      %415 = vmatpush2.msra.mxu0 0.0
      %416 = vmatprep.subr.mxu0 0.0
      %417 = vmatpush2.msra.mxu0 0.0
      %418 = vmatprep.subr.mxu0 0.0
      %419 = vmatpush2.msra.mxu0 0.0
      %420 = vmatprep.subr.mxu0 0.0
      %421 = vmatpush2.msra.mxu0 0.0
      %422 = vmatprep.subr.mxu0 0.0
      %423 = vmatpush2.msra.mxu0 0.0
      %424 = vmatprep.subr.mxu0 0.0
      %425 = vmatpush2.msra.mxu0 0.0
      %426 = vmatprep.subr.mxu0 0.0
      %427 = vmatpush2.msra.mxu0 0.0
      %428 = vmatprep.subr.mxu0 0.0
      %429 = vmatpush2.msra.mxu0 0.0
      %430 = vmatprep.subr.mxu0 0.0
      %431 = vmatpush2.msra.mxu0 0.0
      %432 = vmatprep.subr.mxu0 0.0
      %433 = vmatpush2.msra.mxu0 0.0
      %434 = vmatprep.subr.mxu0 0.0
      %435 = vmatpush2.msra.mxu0 0.0
      %436 = vmatprep.subr.mxu0 0.0
      %437 = vmatpush2.msra.mxu0 0.0
      %438 = vmatprep.subr.mxu0 0.0
      %439 = vmatpush2.msra.mxu0 0.0
      %440 = vmatprep.subr.mxu0 0.0
      %441 = vmatpush2.msra.mxu0 0.0
      %442 = vmatprep.subr.mxu0 0.0
      %443 = vmatpush2.msra.mxu0 0.0
      %444 = vmatprep.mubr.f32.mxu0 0.0
      %445 = vmatmul.mubr.f32.gmra.mxu0 %v371
      %v446 = vpop.f32.mrf.mxu0
      %v447 = vadd.f32 0.0, %v446
      %v448 = vpop.f32.mrf.mxu0
      %449 = vmatprep.mubr.f32.mxu0 0.0
      %450 = vmatmul.mubr.f32.gmra.mxu0 %v374
      %v451 = vpop.f32.mrf.mxu0
      %v452 = vadd.f32 0.0, %v451
      %v453 = vpop.f32.mrf.mxu0
      %454 = vdwg.mxu0
      %v455 = vld [vmem:[#allocation3] sm:$0xff]
      %v456 = vld [vmem:[#allocation3 + $0x8] sm:$0xff]
      %458 = vset.pattern.permute.xlu0 0
      %459 = vperm.xlu0 %458, %v455
      %v460 = vpop.permute.xlu0 %459
      %463 = vset.pattern.permute.xlu0 0
      %464 = vperm.xlu0 %463, %v456
      %v465 = vpop.permute.xlu0 %464
      %v467 = vadd.f32 %v460, %v368
      %v468 = vadd.f32 %v465, %v368
      %v469 = vmul.f32 %v447, 2.0
      %v470 = vmul.f32 %v452, 2.0
      %v471 = vsub.f32 %v467, %v469
      %v472 = vsub.f32 %v468, %v470
      %v473 = vmax.f32 %v471, 0.0
      %v474 = vmax.f32 %v472, 0.0
      %v475 = vsub.f32 0.0, %v473
      %v476 = vsub.f32 0.0, %v474
      %v477 = vpack.c.bf16 %v476, %v475
      %v479 = vmul.bf16 %v477, 1069105081
      %v480 = vpow.bf16.pop %v479
      %v481 = vld [vmem:[#allocation2] sm:$0xff]
      %v482 = vld [vmem:[#allocation2 + $0x8] sm:$0xff]
      %v483 = vld [vmem:[%s306] sm:$0xf]
      %v484 = vld [vmem:[%s306 + $0x4] sm:$0xf]
      %v487 = vunpack.c.l.b16 %v483
      %v488 = vunpack.c.l.b16 %v484
      %v489 = vpack.c.b16 %v488, %v487
      %vm491 = vcmask 130048
      %v493 = vsel %vm491, %v480, 0
      %495 = vmatprep.subr.bf16.mxu0 0
      %496 = vmatpush1.bf16.msra.mxu0 0
      %497 = vmatprep.subr.bf16.mxu0 0
      %498 = vmatpush1.bf16.msra.mxu0 0
      %499 = vmatprep.subr.bf16.mxu0 0
      %500 = vmatpush1.bf16.msra.mxu0 0
      %501 = vmatprep.subr.bf16.mxu0 0
      %502 = vmatpush1.bf16.msra.mxu0 0
      %503 = vmatprep.subr.bf16.mxu0 0
      %504 = vmatpush1.bf16.msra.mxu0 0
      %505 = vmatprep.subr.bf16.mxu0 0
      %506 = vmatpush1.bf16.msra.mxu0 0
      %507 = vmatprep.subr.bf16.mxu0 0
      %508 = vmatpush1.bf16.msra.mxu0 0
      %509 = vmatprep.subr.bf16.mxu0 0
      %510 = vmatpush1.bf16.msra.mxu0 %v489
      %511 = vmatprep.subr.bf16.mxu0 0
      %512 = vmatpush2.bf16.msra.mxu0 0
      %513 = vmatprep.subr.bf16.mxu0 0
      %514 = vmatpush2.bf16.msra.mxu0 0
      %515 = vmatprep.subr.bf16.mxu0 0
      %516 = vmatpush2.bf16.msra.mxu0 0
      %517 = vmatprep.subr.bf16.mxu0 0
      %518 = vmatpush2.bf16.msra.mxu0 0
      %519 = vmatprep.subr.bf16.mxu0 0
      %520 = vmatpush2.bf16.msra.mxu0 0
      %521 = vmatprep.subr.bf16.mxu0 0
      %522 = vmatpush2.bf16.msra.mxu0 0
      %523 = vmatprep.subr.bf16.mxu0 0
      %524 = vmatpush2.bf16.msra.mxu0 0
      %525 = vmatprep.subr.bf16.mxu0 0
      %526 = vmatpush2.bf16.msra.mxu0 0
      %527 = vmatprep.mubr.bf16.mxu0 0
      %528 = vmatmul.mubr.bf16.gmra.mxu0 %v493
      %v529 = vpop.f32.mrf.mxu0
      %v530 = vadd.f32 0.0, %v529
      %v531 = vpop.f32.mrf.mxu0
      %v532 = vpop.f32.mrf.mxu0
      %v533 = vadd.f32 0.0, %v532
      %v534 = vpop.f32.mrf.mxu0
      %535 = vdwg.mxu0
      %v536 = vadd.f32 %v481, %v530
      %v537 = vadd.f32 %v482, %v533
      %vm538 = vcmask 261120
      %539 = vst.msk [vmem:[#allocation2] sm:$0xff] %vm538, %v536
      %540 = vst.msk [vmem:[#allocation2 + $0x8] sm:$0xff] %vm538, %v537
      // Predicated region
      $region45: #{depthwise_convolution.3} parent=39 // pred_check
        %p541 = pneg %p336
      $region46: #{depthwise_convolution.3} parent=39 // pred_check_branch
        %543 = sbr.rel (%p541) target = $region48
      $region47: #{depthwise_convolution.3} parent=39 // pred_region
        %v544 = vld [vmem:[#allocation2] sm:$0xff]
        %v545 = vld [vmem:[#allocation2 + $0x8] sm:$0xff]
        %v546 = vmul.f32 %v544, 0.0625
        %v547 = vmul.f32 %v545, 0.0625
        %v548 = vld [vmem:[%s3] sm:$0xff]
        %v549 = vld [vmem:[%s3 + $0x8] sm:$0xff]
        %v550 = vld [vmem:[%s3 + $0x10] sm:$0xff]
        %v551 = vld [vmem:[%s3 + $0x18] sm:$0xff]
        %v553 = vsel %vm538, %v546, 0
        %v556 = vsel %vm538, %v547, 0
        %558 = vmatprep.subr.mxu0 0.0
        %559 = vmatpush1.msra.mxu0 0.0
        %560 = vmatprep.subr.mxu0 0.0
        %561 = vmatpush1.msra.mxu0 0.0
        %562 = vmatprep.subr.mxu0 0.0
        %563 = vmatpush1.msra.mxu0 0.0
        %564 = vmatprep.subr.mxu0 0.0
        %565 = vmatpush1.msra.mxu0 0.0
        %566 = vmatprep.subr.mxu0 0.0
        %567 = vmatpush1.msra.mxu0 0.0
        %568 = vmatprep.subr.mxu0 0.0
        %569 = vmatpush1.msra.mxu0 0.0
        %570 = vmatprep.subr.mxu0 0.0
        %571 = vmatpush1.msra.mxu0 0.0
        %572 = vmatprep.subr.mxu0 0.0
        %573 = vmatpush1.msra.mxu0 0.0
        %574 = vmatprep.subr.mxu0 0.0
        %575 = vmatpush1.msra.mxu0 0.0
        %576 = vmatprep.subr.mxu0 0.0
        %577 = vmatpush1.msra.mxu0 0.0
        %578 = vmatprep.subr.mxu0 0.0
        %579 = vmatpush1.msra.mxu0 0.0
        %580 = vmatprep.subr.mxu0 0.0
        %581 = vmatpush1.msra.mxu0 0.0
        %582 = vmatprep.subr.mxu0 0.0
        %583 = vmatpush1.msra.mxu0 %v551
        %584 = vmatprep.subr.mxu0 0.0
        %585 = vmatpush1.msra.mxu0 %v550
        %586 = vmatprep.subr.mxu0 0.0
        %587 = vmatpush1.msra.mxu0 %v549
        %588 = vmatprep.subr.mxu0 0.0
        %589 = vmatpush1.msra.mxu0 %v548
        %590 = vmatprep.subr.mxu0 0.0
        %591 = vmatpush2.msra.mxu0 0.0
        %592 = vmatprep.subr.mxu0 0.0
        %593 = vmatpush2.msra.mxu0 0.0
        %594 = vmatprep.subr.mxu0 0.0
        %595 = vmatpush2.msra.mxu0 0.0
        %596 = vmatprep.subr.mxu0 0.0
        %597 = vmatpush2.msra.mxu0 0.0
        %598 = vmatprep.subr.mxu0 0.0
        %599 = vmatpush2.msra.mxu0 0.0
        %600 = vmatprep.subr.mxu0 0.0
        %601 = vmatpush2.msra.mxu0 0.0
        %602 = vmatprep.subr.mxu0 0.0
        %603 = vmatpush2.msra.mxu0 0.0
        %604 = vmatprep.subr.mxu0 0.0
        %605 = vmatpush2.msra.mxu0 0.0
        %606 = vmatprep.subr.mxu0 0.0
        %607 = vmatpush2.msra.mxu0 0.0
        %608 = vmatprep.subr.mxu0 0.0
        %609 = vmatpush2.msra.mxu0 0.0
        %610 = vmatprep.subr.mxu0 0.0
        %611 = vmatpush2.msra.mxu0 0.0
        %612 = vmatprep.subr.mxu0 0.0
        %613 = vmatpush2.msra.mxu0 0.0
        %614 = vmatprep.subr.mxu0 0.0
        %615 = vmatpush2.msra.mxu0 0.0
        %616 = vmatprep.subr.mxu0 0.0
        %617 = vmatpush2.msra.mxu0 0.0
        %618 = vmatprep.subr.mxu0 0.0
        %619 = vmatpush2.msra.mxu0 0.0
        %620 = vmatprep.subr.mxu0 0.0
        %621 = vmatpush2.msra.mxu0 0.0
        %622 = vmatprep.mubr.f32.mxu0 0.0
        %623 = vmatmul.mubr.f32.gmra.mxu0 %v553
        %v624 = vpop.f32.mrf.mxu0
        %v625 = vadd.f32 0.0, %v624
        %v626 = vpop.f32.mrf.mxu0
        %627 = vmatprep.mubr.f32.mxu0 0.0
        %628 = vmatmul.mubr.f32.gmra.mxu0 %v556
        %v629 = vpop.f32.mrf.mxu0
        %v630 = vadd.f32 0.0, %v629
        %v631 = vpop.f32.mrf.mxu0
        %632 = vdwg.mxu0
        %v633 = vxor.u32 %v625, 2147483648
        %v634 = vxor.u32 %v630, 2147483648
        %v635 = vmul.f32 %v633, 1.442695
        %v636 = vpow.pop %v635
        %v637 = vmul.f32 %v634, 1.442695
        %v638 = vpow.pop %v637
        %v639 = vadd.f32 %v636, 1.0
        %v640 = vadd.f32 %v638, 1.0
        %v641 = vrcp.pop %v639
        %v642 = vmul.f32 1.0, %v641
        %v643 = vrcp.pop %v640
        %v644 = vmul.f32 1.0, %v643
        %v645 = vmul.f32 %v625, %v642
        %v646 = vmul.f32 %v630, %v644
        %v647 = vld [vmem:[%s4] sm:$0xff]
        %v648 = vld [vmem:[%s4 + $0x8] sm:$0xff]
        %v649 = vld [vmem:[%s4 + $0x10] sm:$0xff]
        %v650 = vld [vmem:[%s4 + $0x18] sm:$0xff]
        %v652 = vsel %vm538, %v645, 0
        %v655 = vsel %vm538, %v646, 0
        %657 = vmatprep.subr.mxu0 0.0
        %658 = vmatpush1.msra.mxu0 0.0
        %659 = vmatprep.subr.mxu0 0.0
        %660 = vmatpush1.msra.mxu0 0.0
        %661 = vmatprep.subr.mxu0 0.0
        %662 = vmatpush1.msra.mxu0 0.0
        %663 = vmatprep.subr.mxu0 0.0
        %664 = vmatpush1.msra.mxu0 0.0
        %665 = vmatprep.subr.mxu0 0.0
        %666 = vmatpush1.msra.mxu0 0.0
        %667 = vmatprep.subr.mxu0 0.0
        %668 = vmatpush1.msra.mxu0 0.0
        %669 = vmatprep.subr.mxu0 0.0
        %670 = vmatpush1.msra.mxu0 0.0
        %671 = vmatprep.subr.mxu0 0.0
        %672 = vmatpush1.msra.mxu0 0.0
        %673 = vmatprep.subr.mxu0 0.0
        %674 = vmatpush1.msra.mxu0 0.0
        %675 = vmatprep.subr.mxu0 0.0
        %676 = vmatpush1.msra.mxu0 0.0
        %677 = vmatprep.subr.mxu0 0.0
        %678 = vmatpush1.msra.mxu0 0.0
        %679 = vmatprep.subr.mxu0 0.0
        %680 = vmatpush1.msra.mxu0 0.0
        %681 = vmatprep.subr.mxu0 0.0
        %682 = vmatpush1.msra.mxu0 %v650
        %683 = vmatprep.subr.mxu0 0.0
        %684 = vmatpush1.msra.mxu0 %v649
        %685 = vmatprep.subr.mxu0 0.0
        %686 = vmatpush1.msra.mxu0 %v648
        %687 = vmatprep.subr.mxu0 0.0
        %688 = vmatpush1.msra.mxu0 %v647
        %689 = vmatprep.subr.mxu0 0.0
        %690 = vmatpush2.msra.mxu0 0.0
        %691 = vmatprep.subr.mxu0 0.0
        %692 = vmatpush2.msra.mxu0 0.0
        %693 = vmatprep.subr.mxu0 0.0
        %694 = vmatpush2.msra.mxu0 0.0
        %695 = vmatprep.subr.mxu0 0.0
        %696 = vmatpush2.msra.mxu0 0.0
        %697 = vmatprep.subr.mxu0 0.0
        %698 = vmatpush2.msra.mxu0 0.0
        %699 = vmatprep.subr.mxu0 0.0
        %700 = vmatpush2.msra.mxu0 0.0
        %701 = vmatprep.subr.mxu0 0.0
        %702 = vmatpush2.msra.mxu0 0.0
        %703 = vmatprep.subr.mxu0 0.0
        %704 = vmatpush2.msra.mxu0 0.0
        %705 = vmatprep.subr.mxu0 0.0
        %706 = vmatpush2.msra.mxu0 0.0
        %707 = vmatprep.subr.mxu0 0.0
        %708 = vmatpush2.msra.mxu0 0.0
        %709 = vmatprep.subr.mxu0 0.0
        %710 = vmatpush2.msra.mxu0 0.0
        %711 = vmatprep.subr.mxu0 0.0
        %712 = vmatpush2.msra.mxu0 0.0
        %713 = vmatprep.subr.mxu0 0.0
        %714 = vmatpush2.msra.mxu0 0.0
        %715 = vmatprep.subr.mxu0 0.0
        %716 = vmatpush2.msra.mxu0 0.0
        %717 = vmatprep.subr.mxu0 0.0
        %718 = vmatpush2.msra.mxu0 0.0
        %719 = vmatprep.subr.mxu0 0.0
        %720 = vmatpush2.msra.mxu0 0.0
        %721 = vmatprep.mubr.f32.mxu0 0.0
        %722 = vmatmul.mubr.f32.gmra.mxu0 %v652
        %v723 = vpop.f32.mrf.mxu0
        %v724 = vadd.f32 0.0, %v723
        %v725 = vpop.f32.mrf.mxu0
        %726 = vmatprep.mubr.f32.mxu0 0.0
        %727 = vmatmul.mubr.f32.gmra.mxu0 %v655
        %v728 = vpop.f32.mrf.mxu0
        %v729 = vadd.f32 0.0, %v728
        %v730 = vpop.f32.mrf.mxu0
        %731 = vdwg.mxu0
        %v732 = vxor.u32 %v724, 2147483648
        %v733 = vxor.u32 %v729, 2147483648
        %v734 = vmul.f32 %v732, 1.442695
        %v735 = vpow.pop %v734
        %v736 = vmul.f32 %v733, 1.442695
        %v737 = vpow.pop %v736
        %v738 = vadd.f32 %v735, 1.0
        %v739 = vadd.f32 %v737, 1.0
        %v740 = vrcp.pop %v738
        %v741 = vmul.f32 1.0, %v740
        %v742 = vrcp.pop %v739
        %v743 = vmul.f32 1.0, %v742
        %v744 = vmul.f32 %v724, %v741
        %v745 = vmul.f32 %v729, %v743
        %vm746 = vcmask 64512
        %747 = vst.msk [vmem:[%s333] sm:$0xff] %vm746, %v744
        %748 = vst.msk [vmem:[%s333 + $0x8] sm:$0xff] %vm746, %v745
      $region48: #{depthwise_convolution.3} parent=39 // pred_fallthru
        _
      %s749 = smul.u32 2, %s22
      %p750 = scmp.lt.s32.totalorder %s21, 1
      %s751 = scalar_select %p750, %s21, 1
      %p752 = scmp.lt.s32.totalorder %s749, 1
      %s753 = scalar_select %p752, %s749, 1
      %s754 = smul.addr %s751, 2
      %s755 = sadd.s32 %s753, %s754
      %s756 = smul.addr %s755, 8
      %s757 = scalar_lea.vmem %s5, %s756
      // Predicated region
      $region49: #{depthwise_convolution.3} parent=39 // pred_check
        %p758 = pneg %p181
      $region50: #{depthwise_convolution.3} parent=39 // pred_check_branch
        %760 = sbr.rel (%p758) target = $region52
      $region51: #{depthwise_convolution.3} parent=39 // pred_region
        %s761 = smul.u32 2, %s22
      $region52: #{depthwise_convolution.3} parent=39 // pred_fallthru
        _
    $region40: #{depthwise_convolution.3} parent=5 // pred_fallthru
      _
    %p762 = scmp.le.s32.totalorder 2, %s11
    // Predicated region
    $region53: #{depthwise_convolution.3} parent=5 // pred_check
      %p763 = pneg %p762
    $region54: #{depthwise_convolution.3} parent=5 // pred_check_branch
      %765 = sbr.rel (%p763) target = $region56
    $region55: #{depthwise_convolution.3} parent=5 // pred_region
      %s766 = ssub.s32 %s11, 2
      // Predicated region
      $region57: #{depthwise_convolution.3} parent=55 // pred_check
        %p767 = pneg %p187
      $region58: #{depthwise_convolution.3} parent=55 // pred_check_branch
        %769 = sbr.rel (%p767) target = $region60
      $region59: #{depthwise_convolution.3} parent=55 // pred_region
        %s770 = smul.u32 2, %s25
        %p771 = scmp.lt.s32.totalorder %s24, 1
        %s772 = scalar_select %p771, %s24, 1
        %p773 = scmp.lt.s32.totalorder %s770, 1
        %s774 = scalar_select %p773, %s770, 1
        %s775 = smul.addr %s772, 2
        %s776 = sadd.s32 %s774, %s775
        %s777 = smul.addr %s776, 8
        %s778 = scalar_lea.vmem %s5, %s777
      $region60: #{depthwise_convolution.3} parent=55 // pred_fallthru
        _
    $region56: #{depthwise_convolution.3} parent=5 // pred_fallthru
      _
  $region6: #{depthwise_convolution.3} parent=0 // loop_footer
    %s15 = sadd.s32 1, %s11
  $region7: #{depthwise_convolution.3} parent=0 // loop_footer_branch
    %10 = sbr.rel target = $region3
  $region8: #{depthwise_convolution.3} parent=0 // loop_exit
    _

</llo_original>
